<compile_context>
chip_gen: v7x
topology: tpu7x:2x2x1
jax: 0.10.0
libtpu: 0.0.40
codegen_flags: <defaults>
</compile_context>

<pallas_src>
import functools
import math

import jax
import jax.numpy as jnp
from jax.experimental import pallas as pl
from jax.experimental.pallas import tpu as pltpu


# ----------------------------- glue (plain JAX) -----------------------------

def _duplicate_interleave(m):
    # torch: m.view(-1,1).repeat(1,2).view(dim0,-1) == repeat each elem twice
    return jnp.repeat(m, 2, axis=-1)


def _xpos_factors(seq_len, head_dim, scale_base=512, downscale=False):
    """sin/cos factors (already scaled + duplicate-interleaved), shape (S, head_dim)."""
    scale_buf = (jnp.arange(0, head_dim, 2, dtype=jnp.float32) + 0.4 * head_dim) / (
        1.4 * head_dim
    )
    pos = jnp.arange(seq_len, dtype=jnp.float32)
    scale = scale_buf[None, :] ** (pos / scale_base)[:, None]  # (S, head_dim//2)
    dim = head_dim // 2
    inv_freq = 1.0 / (10000.0 ** (jnp.arange(dim, dtype=jnp.float32) / dim))
    sinusoid = pos[:, None] * inv_freq[None, :]
    sin = jnp.sin(sinusoid)
    cos = jnp.cos(sinusoid)
    if downscale:
        scale = 1.0 / scale
    return _duplicate_interleave(sin * scale), _duplicate_interleave(cos * scale)


def _rotate_matrix(h):
    """R such that x @ R == rotate_every_two(x)."""
    R = jnp.zeros((h, h), dtype=jnp.float32)
    even = jnp.arange(0, h, 2)
    R = R.at[even, even + 1].set(1.0)   # out[2i+1] =  x[2i]
    R = R.at[even + 1, even].set(-1.0)  # out[2i]   = -x[2i+1]
    return R


# ------------------------------ Pallas kernel -------------------------------

def _retention_kernel(
    xq_ref,    # (1, tq, H)  bf16 : X rows for this q tile
    xk_ref,    # (1, tk, H)  bf16 : X rows for this k tile
    wq2_ref,   # (H, 2H)     bf16 : [W_Q | W_Q @ R]
    wkv_ref,   # (H, 3H)     bf16 : [W_K | W_K @ R | W_V]
    xpq_ref,   # (tq, 4H)    f32  : [cos_q|sin_q|cos_k|sin_k] at q rows (lane-dense)
    xpk_ref,   # (tk, 4H)    f32  : same table at k rows
    o_ref,     # (1, tq, H)  f32
    qrot_ref,  # scratch (tq, H) bf16
    acc_ref,   # scratch (tq, H) f32
    *, hidden, tq, tk, log_gamma,
):
    qi = pl.program_id(1)
    ki = pl.program_id(2)
    H = hidden

    # ---- once per q tile: fused Q projection (Q and Q@R in one matmul) ------
    @pl.when(ki == 0)
    def _init():
        proj_q = jnp.dot(xq_ref[0], wq2_ref[...],
                         preferred_element_type=jnp.float32)      # (tq, 2H) f32
        q, qr = proj_q[:, :H], proj_q[:, H:]
        cos_q, sin_q = xpq_ref[:, :H], xpq_ref[:, H:2 * H]
        qrot_ref[...] = (q * cos_q + qr * sin_q).astype(qrot_ref.dtype)
        acc_ref[...] = jnp.zeros_like(acc_ref)

    # ---- causal skip: a k tile strictly in the future contributes nothing ---
    @pl.when(ki * tk <= qi * tq + (tq - 1))
    def _body():
        # fused K / K@R / V projection: one wide bf16 matmul, f32 accumulation
        proj_kv = jnp.dot(xk_ref[0], wkv_ref[...],
                          preferred_element_type=jnp.float32)     # (tk, 3H) f32
        k, kr, v = proj_kv[:, :H], proj_kv[:, H:2 * H], proj_kv[:, 2 * H:]
        cos_k, sin_k = xpk_ref[:, 2 * H:3 * H], xpk_ref[:, 3 * H:]
        k_rot = k * cos_k + kr * sin_k                            # f32

        # att = q_rot @ k_rot^T  (contract on hidden, no explicit transpose)
        att = jax.lax.dot_general(
            qrot_ref[...], k_rot.astype(jnp.bfloat16),
            dimension_numbers=(((1,), (1,)), ((), ())),
            preferred_element_type=jnp.float32)                   # (tq, tk)

        # decay computed in-kernel (no (S,S) HBM input, no O(S^2) VMEM)
        n = qi * tq + jax.lax.broadcasted_iota(jnp.int32, (tq, tk), 0)
        m = ki * tk + jax.lax.broadcasted_iota(jnp.int32, (tq, tk), 1)
        causal = n >= m
        diff = jnp.where(causal, (n - m).astype(jnp.float32), 0.0)  # masked exponent
        decay = jnp.where(causal, jnp.exp(diff * log_gamma), 0.0)

        acc_ref[...] += jnp.dot((att * decay).astype(jnp.bfloat16),
                                v.astype(jnp.bfloat16),
                                preferred_element_type=jnp.float32)

    @pl.when(ki == pl.num_programs(2) - 1)
    def _finalize():
        o_ref[0] = acc_ref[...].astype(o_ref.dtype)


@functools.partial(jax.jit, static_argnames=("gamma", "tq", "tk"))
def simple_retention(x, w_q, w_k, w_v, gamma, tq=None, tk=None):
    """x: (B, Hd, S, H) float32; weights (H, H). Returns (B, Hd, S, H) float32."""
    B, Hd, S, H = x.shape
    if tq is None:
        tq = min(S, 128)
    if tk is None:
        tk = min(S, 128)
    assert S % tq == 0 and S % tk == 0, "sequence must be divisible by tile sizes"
    BH = B * Hd

    # host-side (positional-only) constants
    R = _rotate_matrix(H)
    sin_q, cos_q = _xpos_factors(S, H, downscale=False)
    sin_k, cos_k = _xpos_factors(S, H, downscale=True)
    # one lane-dense xpos table: [cos_q | sin_q | cos_k | sin_k]  -> (S, 4H)
    xpos = jnp.concatenate([cos_q, sin_q, cos_k, sin_k], axis=1).astype(jnp.float32)

    # fused bf16 projection weights (rotate_every_two folded via R)
    wq2 = jnp.concatenate([w_q, w_q @ R], axis=1).astype(jnp.bfloat16)         # (H, 2H)
    wkv = jnp.concatenate([w_k, w_k @ R, w_v], axis=1).astype(jnp.bfloat16)    # (H, 3H)

    x_bh = x.reshape(BH, S, H).astype(jnp.bfloat16)

    n_q, n_k = S // tq, S // tk

    kernel = functools.partial(
        _retention_kernel, hidden=H, tq=tq, tk=tk, log_gamma=float(math.log(gamma)))

    # Per-step VMEM (bf16 x tiles, f32 xpos tiles, tiny weights, scratch) stays
    # far below the v7x 64 MiB budget for tq=tk<=128; limit set explicitly.
    out = pl.pallas_call(
        kernel,
        out_shape=jax.ShapeDtypeStruct((BH, S, H), jnp.float32),
        grid_spec=pltpu.PrefetchScalarGridSpec(
            num_scalar_prefetch=0,
            grid=(BH, n_q, n_k),
            in_specs=[
                pl.BlockSpec((1, tq, H), lambda bh, qi, ki: (bh, qi, 0)),    # x (q rows)
                pl.BlockSpec((1, tk, H), lambda bh, qi, ki: (bh, ki, 0)),    # x (k rows)
                pl.BlockSpec((H, 2 * H), lambda bh, qi, ki: (0, 0)),         # [Wq | WqR]
                pl.BlockSpec((H, 3 * H), lambda bh, qi, ki: (0, 0)),         # [Wk | WkR | Wv]
                pl.BlockSpec((tq, 4 * H), lambda bh, qi, ki: (qi, 0)),       # xpos @ q rows
                pl.BlockSpec((tk, 4 * H), lambda bh, qi, ki: (ki, 0)),       # xpos @ k rows
            ],
            out_specs=pl.BlockSpec((1, tq, H), lambda bh, qi, ki: (bh, qi, 0)),
            scratch_shapes=[
                pltpu.VMEM((tq, H), jnp.bfloat16),   # q_rot, reused across k tiles
                pltpu.VMEM((tq, H), jnp.float32),    # f32 accumulator
            ],
        ),
        compiler_params=pltpu.CompilerParams(
            dimension_semantics=("parallel", "parallel", "arbitrary"),
            vmem_limit_bytes=64 * 1024 * 1024,
        ),
    )(x_bh, x_bh, wq2, wkv, xpos, xpos)

    return out.reshape(B, Hd, S, H)


# --------------------------- pure-JAX reference ------------------------------

def _rotate_every_two_ref(x):
    x1 = x[..., ::2]
    x2 = x[..., 1::2]
    return jnp.stack((-x2, x1), axis=-1).reshape(*x.shape[:-1], -1)


def _reference(x, w_q, w_k, w_v, gamma):
    B, Hd, S, H = x.shape
    sin_q, cos_q = _xpos_factors(S, H, downscale=False)
    sin_k, cos_k = _xpos_factors(S, H, downscale=True)
    n = jnp.arange(S)[:, None]
    m = jnp.arange(S)[None, :]
    causal = n >= m
    diff = jnp.where(causal, (n - m).astype(jnp.float32), 0.0)
    D = jnp.where(causal, jnp.float32(gamma) ** diff, 0.0)
    Q = x @ w_q
    K = x @ w_k
    V = x @ w_v
    Q = Q * cos_q + _rotate_every_two_ref(Q) * sin_q
    K = K * cos_k + _rotate_every_two_ref(K) * sin_k
    att = jnp.einsum("bhsd,bhtd->bhst", Q, K) * D[None, None]
    return att @ V


# ---------------------------------- main -------------------------------------

if __name__ == "__main__":
    B, Hd, S, H = 2, 2, 8, 32
    gamma = 0.9

    key = jax.random.PRNGKey(0)
    kx, kq, kk, kv = jax.random.split(key, 4)
    x = jax.random.normal(kx, (B, Hd, S, H), dtype=jnp.float32)
    # deterministic param init mirroring nn.Parameter(torch.randn(H,H)/H)
    w_q = jax.random.normal(kq, (H, H), dtype=jnp.float32) / H
    w_k = jax.random.normal(kk, (H, H), dtype=jnp.float32) / H
    w_v = jax.random.normal(kv, (H, H), dtype=jnp.float32) / H

    out = simple_retention(x, w_q, w_k, w_v, gamma)
    out = jax.block_until_ready(out)

    ref = _reference(x, w_q, w_k, w_v, gamma)
    assert out.shape == (B, Hd, S, H)
    # bf16 MXU feeds (f32 accumulation) => relaxed tolerance vs f32 reference
    assert jnp.allclose(out, ref, atol=2e-2, rtol=2e-2), "mismatch vs reference"

    print("KERNEL_OK")
</pallas_src>

<mosaic_0001>
module attributes {stable_mosaic.version = 11 : i64} {
  func.func @_retention_kernel(%arg0: i32, %arg1: i32, %arg2: i32, %arg3: memref<1x8x32xbf16, #tpu.memory_space<vmem>>, %arg4: memref<1x8x32xbf16, #tpu.memory_space<vmem>>, %arg5: memref<32x64xbf16, #tpu.memory_space<vmem>>, %arg6: memref<32x96xbf16, #tpu.memory_space<vmem>>, %arg7: memref<8x128xf32, #tpu.memory_space<vmem>>, %arg8: memref<8x128xf32, #tpu.memory_space<vmem>>, %arg9: memref<1x8x32xf32, #tpu.memory_space<vmem>>, %arg10: memref<8x32xbf16, #tpu.memory_space<vmem>>, %arg11: memref<8x32xf32, #tpu.memory_space<vmem>>) attributes {dimension_semantics = [#tpu.dimension_semantics<parallel>, #tpu.dimension_semantics<parallel>, #tpu.dimension_semantics<arbitrary>], iteration_bounds = array<i64: 4, 1, 1>, scalar_prefetch = 0 : i64, scratch_operands = 2 : i64, tpu.core_type = #tpu.core_type<tc>, window_params = [{transform_indices = @transform_0, window_bounds = array<i64: 1, 8, 32>}, {transform_indices = @transform_1, window_bounds = array<i64: 1, 8, 32>}, {pipeline_mode = #tpu.pipeline_mode<synchronous>, transform_indices = @transform_2, window_bounds = array<i64: 32, 64>}, {pipeline_mode = #tpu.pipeline_mode<synchronous>, transform_indices = @transform_3, window_bounds = array<i64: 32, 96>}, {transform_indices = @transform_4, window_bounds = array<i64: 8, 128>}, {transform_indices = @transform_5, window_bounds = array<i64: 8, 128>}, {transform_indices = @transform_6, window_bounds = array<i64: 1, 8, 32>}]} {
    %c0_i32 = arith.constant 0 : i32
    %0 = arith.cmpi eq, %arg2, %c0_i32 : i32
    %1 = arith.extui %0 : i1 to i32
    %c0_i32_0 = arith.constant 0 : i32
    %2 = arith.cmpi ne, %1, %c0_i32_0 : i32
    scf.if %2 {
      %c0 = arith.constant 0 : index
      %c0_5 = arith.constant 0 : index
      %c0_6 = arith.constant 0 : index
      %12 = vector.load %arg3[%c0, %c0_5, %c0_6] : memref<1x8x32xbf16, #tpu.memory_space<vmem>>, vector<1x8x32xbf16>
      %13 = vector.shape_cast %12 : vector<1x8x32xbf16> to vector<8x32xbf16>
      %c0_7 = arith.constant 0 : index
      %c0_8 = arith.constant 0 : index
      %14 = vector.load %arg5[%c0_7, %c0_8] : memref<32x64xbf16, #tpu.memory_space<vmem>>, vector<32x64xbf16>
      %cst = arith.constant dense<0.000000e+00> : vector<8x64xf32>
      %15 = tpu.matmul %13, %14, %cst {dimension_numbers = #tpu.dot_dimension_numbers<[1], [0], [0], [1], [0, 0, 1, 1], [], []>} : vector<8x32xbf16>, vector<32x64xbf16>, vector<8x64xf32> -> vector<8x64xf32>
      %16 = vector.extract_strided_slice %15 {offsets = [0, 0], sizes = [8, 32], strides = [1, 1]} : vector<8x64xf32> to vector<8x32xf32>
      %17 = vector.extract_strided_slice %15 {offsets = [0, 32], sizes = [8, 32], strides = [1, 1]} : vector<8x64xf32> to vector<8x32xf32>
      %c0_9 = arith.constant 0 : index
      %c0_10 = arith.constant 0 : index
      %18 = vector.load %arg7[%c0_9, %c0_10] : memref<8x128xf32, #tpu.memory_space<vmem>>, vector<8x32xf32>
      %c0_11 = arith.constant 0 : index
      %c32 = arith.constant 32 : index
      %19 = vector.load %arg7[%c0_11, %c32] : memref<8x128xf32, #tpu.memory_space<vmem>>, vector<8x32xf32>
      %20 = arith.mulf %16, %18 : vector<8x32xf32>
      %21 = arith.mulf %17, %19 : vector<8x32xf32>
      %22 = arith.addf %20, %21 : vector<8x32xf32>
      %23 = arith.truncf %22 : vector<8x32xf32> to vector<8x32xbf16>
      %c0_12 = arith.constant 0 : index
      %c0_13 = arith.constant 0 : index
      %24 = vector.load %arg10[%c0_12, %c0_13] : memref<8x32xbf16, #tpu.memory_space<vmem>>, vector<8x32xbf16>
      tpu.vector_store %arg10[%c0_12, %c0_13], %23 {strides = array<i32>} : memref<8x32xbf16, #tpu.memory_space<vmem>>, vector<8x32xbf16>,
      %cst_14 = arith.constant 0.000000e+00 : f32
      %25 = vector.broadcast %cst_14 : f32 to vector<8x32xf32>
      %c0_15 = arith.constant 0 : index
      %c0_16 = arith.constant 0 : index
      %26 = vector.load %arg11[%c0_15, %c0_16] : memref<8x32xf32, #tpu.memory_space<vmem>>, vector<8x32xf32>
      tpu.vector_store %arg11[%c0_15, %c0_16], %25 {strides = array<i32>} : memref<8x32xf32, #tpu.memory_space<vmem>>, vector<8x32xf32>,
    } else {
    }
    %c8_i32 = arith.constant 8 : i32
    %3 = arith.muli %arg2, %c8_i32 : i32
    %c8_i32_1 = arith.constant 8 : i32
    %4 = arith.muli %arg1, %c8_i32_1 : i32
    %c7_i32 = arith.constant 7 : i32
    %5 = arith.addi %4, %c7_i32 : i32
    %6 = arith.cmpi sle, %3, %5 : i32
    %7 = arith.extui %6 : i1 to i32
    %c0_i32_2 = arith.constant 0 : i32
    %8 = arith.cmpi ne, %7, %c0_i32_2 : i32
    scf.if %8 {
      %c0 = arith.constant 0 : index
      %c0_5 = arith.constant 0 : index
      %c0_6 = arith.constant 0 : index
      %12 = vector.load %arg4[%c0, %c0_5, %c0_6] : memref<1x8x32xbf16, #tpu.memory_space<vmem>>, vector<1x8x32xbf16>
      %13 = vector.shape_cast %12 : vector<1x8x32xbf16> to vector<8x32xbf16>
      %c0_7 = arith.constant 0 : index
      %c0_8 = arith.constant 0 : index
      %14 = vector.load %arg6[%c0_7, %c0_8] : memref<32x96xbf16, #tpu.memory_space<vmem>>, vector<32x96xbf16>
      %cst = arith.constant dense<0.000000e+00> : vector<8x96xf32>
      %15 = tpu.matmul %13, %14, %cst {dimension_numbers = #tpu.dot_dimension_numbers<[1], [0], [0], [1], [0, 0, 1, 1], [], []>} : vector<8x32xbf16>, vector<32x96xbf16>, vector<8x96xf32> -> vector<8x96xf32>
      %16 = vector.extract_strided_slice %15 {offsets = [0, 0], sizes = [8, 32], strides = [1, 1]} : vector<8x96xf32> to vector<8x32xf32>
      %17 = vector.extract_strided_slice %15 {offsets = [0, 32], sizes = [8, 32], strides = [1, 1]} : vector<8x96xf32> to vector<8x32xf32>
      %18 = vector.extract_strided_slice %15 {offsets = [0, 64], sizes = [8, 32], strides = [1, 1]} : vector<8x96xf32> to vector<8x32xf32>
      %c0_9 = arith.constant 0 : index
      %c64 = arith.constant 64 : index
      %19 = vector.load %arg8[%c0_9, %c64] : memref<8x128xf32, #tpu.memory_space<vmem>>, vector<8x32xf32>
      %c0_10 = arith.constant 0 : index
      %c96 = arith.constant 96 : index
      %20 = vector.load %arg8[%c0_10, %c96] : memref<8x128xf32, #tpu.memory_space<vmem>>, vector<8x32xf32>
      %21 = arith.mulf %16, %19 : vector<8x32xf32>
      %22 = arith.mulf %17, %20 : vector<8x32xf32>
      %23 = arith.addf %21, %22 : vector<8x32xf32>
      %c0_11 = arith.constant 0 : index
      %c0_12 = arith.constant 0 : index
      %24 = vector.load %arg10[%c0_11, %c0_12] : memref<8x32xbf16, #tpu.memory_space<vmem>>, vector<8x32xbf16>
      %25 = arith.truncf %23 : vector<8x32xf32> to vector<8x32xbf16>
      %cst_13 = arith.constant dense<0.000000e+00> : vector<8x8xf32>
      %26 = tpu.matmul %24, %25, %cst_13 {dimension_numbers = #tpu.dot_dimension_numbers<[1], [1], [0], [0], [0, 0, 1, 0], [], []>} : vector<8x32xbf16>, vector<8x32xbf16>, vector<8x8xf32> -> vector<8x8xf32>
      %c8_i32_14 = arith.constant 8 : i32
      %27 = arith.muli %arg1, %c8_i32_14 : i32
      %28 = tpu.iota {dimensions = array<i32: 0>} : vector<8x8xi32>
      %29 = vector.broadcast %27 : i32 to vector<8x8xi32>
      %30 = arith.addi %29, %28 : vector<8x8xi32>
      %c8_i32_15 = arith.constant 8 : i32
      %31 = arith.muli %arg2, %c8_i32_15 : i32
      %32 = tpu.iota {dimensions = array<i32: 1>} : vector<8x8xi32>
      %33 = vector.broadcast %31 : i32 to vector<8x8xi32>
      %34 = arith.addi %33, %32 : vector<8x8xi32>
      %35 = arith.cmpi sge, %30, %34 : vector<8x8xi32>
      %36 = arith.subi %30, %34 : vector<8x8xi32>
      %37 = arith.sitofp %36 : vector<8x8xi32> to vector<8x8xf32>
      %cst_16 = arith.constant 0.000000e+00 : f32
      %38 = vector.broadcast %cst_16 : f32 to vector<8x8xf32>
      %39 = arith.select %35, %37, %38 : vector<8x8xi1>, vector<8x8xf32>
      %cst_17 = arith.constant -0.105360515 : f32
      %40 = vector.broadcast %cst_17 : f32 to vector<8x8xf32>
      %41 = arith.mulf %39, %40 : vector<8x8xf32>
      %42 = math.exp %41 : vector<8x8xf32>
      %cst_18 = arith.constant 0.000000e+00 : f32
      %43 = vector.broadcast %cst_18 : f32 to vector<8x8xf32>
      %44 = arith.select %35, %42, %43 : vector<8x8xi1>, vector<8x8xf32>
      %c0_19 = arith.constant 0 : index
      %c0_20 = arith.constant 0 : index
      %45 = vector.load %arg11[%c0_19, %c0_20] : memref<8x32xf32, #tpu.memory_space<vmem>>, vector<8x32xf32>
      %46 = arith.mulf %26, %44 : vector<8x8xf32>
      %47 = arith.truncf %46 : vector<8x8xf32> to vector<8x8xbf16>
      %48 = arith.truncf %18 : vector<8x32xf32> to vector<8x32xbf16>
      %cst_21 = arith.constant dense<0.000000e+00> : vector<8x32xf32>
      %49 = tpu.matmul %47, %48, %cst_21 {dimension_numbers = #tpu.dot_dimension_numbers<[1], [0], [0], [1], [0, 0, 1, 1], [], []>} : vector<8x8xbf16>, vector<8x32xbf16>, vector<8x32xf32> -> vector<8x32xf32>
      %50 = arith.addf %45, %49 : vector<8x32xf32>
      %c0_22 = arith.constant 0 : index
      %c0_23 = arith.constant 0 : index
      %51 = vector.load %arg11[%c0_22, %c0_23] : memref<8x32xf32, #tpu.memory_space<vmem>>, vector<8x32xf32>
      tpu.vector_store %arg11[%c0_22, %c0_23], %50 {strides = array<i32>} : memref<8x32xf32, #tpu.memory_space<vmem>>, vector<8x32xf32>,
    } else {
    }
    %c0_i32_3 = arith.constant 0 : i32
    %9 = arith.cmpi eq, %arg2, %c0_i32_3 : i32
    %10 = arith.extui %9 : i1 to i32
    %c0_i32_4 = arith.constant 0 : i32
    %11 = arith.cmpi ne, %10, %c0_i32_4 : i32
    scf.if %11 {
      %c0 = arith.constant 0 : index
      %c0_5 = arith.constant 0 : index
      %12 = vector.load %arg11[%c0, %c0_5] : memref<8x32xf32, #tpu.memory_space<vmem>>, vector<8x32xf32>
      %c0_6 = arith.constant 0 : index
      %c0_7 = arith.constant 0 : index
      %c0_8 = arith.constant 0 : index
      %13 = vector.load %arg9[%c0_6, %c0_7, %c0_8] : memref<1x8x32xf32, #tpu.memory_space<vmem>>, vector<1x8x32xf32>
      %14 = vector.shape_cast %13 : vector<1x8x32xf32> to vector<8x32xf32>
      %15 = vector.shape_cast %12 : vector<8x32xf32> to vector<1x8x32xf32>
      tpu.vector_store %arg9[%c0_6, %c0_7, %c0_8], %15 {strides = array<i32>} : memref<1x8x32xf32, #tpu.memory_space<vmem>>, vector<1x8x32xf32>,
    } else {
    }
    return
  }
  func.func @transform_0(%arg0: i32, %arg1: i32, %arg2: i32) -> (i32, i32, i32) {
    %c0_i32 = arith.constant 0 : i32
    %c0_i32_0 = arith.constant 0 : i32
    return %arg0, %arg1, %c0_i32 : i32, i32, i32
  }
  func.func @transform_1(%arg0: i32, %arg1: i32, %arg2: i32) -> (i32, i32, i32) {
    %c0_i32 = arith.constant 0 : i32
    %c0_i32_0 = arith.constant 0 : i32
    return %arg0, %arg2, %c0_i32 : i32, i32, i32
  }
  func.func @transform_2(%arg0: i32, %arg1: i32, %arg2: i32) -> (i32, i32) {
    %c0_i32 = arith.constant 0 : i32
    %c0_i32_0 = arith.constant 0 : i32
    %c0_i32_1 = arith.constant 0 : i32
    return %c0_i32, %c0_i32_0 : i32, i32
  }
  func.func @transform_3(%arg0: i32, %arg1: i32, %arg2: i32) -> (i32, i32) {
    %c0_i32 = arith.constant 0 : i32
    %c0_i32_0 = arith.constant 0 : i32
    %c0_i32_1 = arith.constant 0 : i32
    return %c0_i32, %c0_i32_0 : i32, i32
  }
  func.func @transform_4(%arg0: i32, %arg1: i32, %arg2: i32) -> (i32, i32) {
    %c0_i32 = arith.constant 0 : i32
    %c0_i32_0 = arith.constant 0 : i32
    return %arg1, %c0_i32 : i32, i32
  }
  func.func @transform_5(%arg0: i32, %arg1: i32, %arg2: i32) -> (i32, i32) {
    %c0_i32 = arith.constant 0 : i32
    %c0_i32_0 = arith.constant 0 : i32
    return %arg2, %c0_i32 : i32, i32
  }
  func.func @transform_6(%arg0: i32, %arg1: i32, %arg2: i32) -> (i32, i32, i32) {
    %c0_i32 = arith.constant 0 : i32
    %c0_i32_0 = arith.constant 0 : i32
    return %arg0, %arg1, %c0_i32 : i32, i32, i32
  }
}

</mosaic_0001>

<llo_original>
// kernel: simple_retention.1
$region0: #{simple_retention.1}
  #allocation0 [shape = 'u32[]', space=smem, size = 0x4, offset = 0x4, fixed_abs, tag = 'smem constant byte address 0x4 - core index']
  #allocation1 [shape = 'u32[144,128]{1,0:T(1,128)}', space=vmem, size = 0x12000, scoped, tag = 'internal scratch']
  #allocation2 [shape = 'bf16[8,32]{1,0:T(8,128)(2,1)}', space=vmem, size = 0x800, scoped, tag = 'scratch operand']
  #allocation3 [shape = 'f32[8,32]{1,0:T(8,128)}', space=vmem, size = 0x1000, scoped, tag = 'scratch operand']
  %s0 = inlined_call_operand.hbm [shape: bf16[4,8,32], index: 0, kind: input, shape index: {}, may-alias: {0,1}]
  %s1 = inlined_call_operand.hbm [shape: bf16[4,8,32], index: 1, kind: input, shape index: {}, may-alias: {0,1}]
  %s2 = inlined_call_operand.hbm [shape: bf16[32,64], index: 2, kind: input, shape index: {}]
  %s3 = inlined_call_operand.hbm [shape: bf16[32,96], index: 3, kind: input, shape index: {}]
  %s4 = inlined_call_operand.hbm [shape: f32[8,128], index: 4, kind: input, shape index: {}, may-alias: {4,5}]
  %s5 = inlined_call_operand.hbm [shape: f32[8,128], index: 5, kind: input, shape index: {}, may-alias: {4,5}]
  %s6 = inlined_call_operand.hbm [shape: f32[4,8,32], index: 6, kind: output, shape index: {}]
  %s7 = sld [smem:[#allocation0]]
  $region93: #{simple_retention.1} parent=0
    _
  %s9 = ssub.s32 1, %s7
  %s10 = scalar_select 0, %s9, %s7
  $region1: #{simple_retention.1} parent=0
    #allocation4 [shape = 'u8[4096]{0}', space=vmem, size = 0x1000, scoped, tag = 'input window, operand 0']
    #allocation5 [shape = 's32[2]{0}', space=sflag, size = 0x8, scoped, tag = 'scoped memory for simple_retention.1']
    #allocation6 [shape = 's32[2]{0}', space=sflag, size = 0x8, scoped, tag = 'scoped memory for simple_retention.1']
    #allocation7 [shape = 'u8[4096]{0}', space=vmem, size = 0x1000, scoped, tag = 'input window, operand 1']
    #allocation8 [shape = 's32[2]{0}', space=sflag, size = 0x8, scoped, tag = 'scoped memory for simple_retention.1']
    #allocation9 [shape = 'u8[8192]{0}', space=vmem, size = 0x2000, scoped, tag = 'input window, operand 2, single buffered']
    #allocation10 [shape = 'u8[8192]{0}', space=vmem, size = 0x2000, scoped, tag = 'input window, operand 3, single buffered']
    #allocation11 [shape = 's32[1]{0}', space=sflag, size = 0x4, scoped, tag = 'scoped memory for simple_retention.1']
    #allocation12 [shape = 'u8[4096]{0}', space=vmem, size = 0x1000, scoped, tag = 'input window, operand 4, single buffered']
    #allocation13 [shape = 'u8[4096]{0}', space=vmem, size = 0x1000, scoped, tag = 'input window, operand 5, single buffered']
    #allocation14 [shape = 's32[1]{0}', space=sflag, size = 0x4, scoped, tag = 'scoped memory for simple_retention.1']
    #allocation15 [shape = 'u8[8192]{0}', space=vmem, size = 0x2000, scoped, tag = 'output window, operand 0']
    %11 = vsyncpa [#allocation5], 0
    %s12 = scalar_lea.sflag [#allocation5], 1
    %13 = vsyncpa %s12, 0
    %14 = vsyncpa [#allocation8], 0
    %s15 = scalar_lea.sflag [#allocation8], 1
    %16 = vsyncpa %s15, 0
    %17 = vsyncpa [#allocation11], 0
    %18 = vsyncpa [#allocation14], 0
    %19 = vsyncpa [#allocation6], 0
    %s20 = scalar_lea.sflag [#allocation6], 1
    %21 = vsyncpa %s20, 0
    loop: start=0, step=1, limit=6
    $region2: #{simple_retention.1} parent=1 // loop_pre_header
      _
    $region3: #{simple_retention.1} parent=1 // loop_header
      %s23 = sphi 0, %s27
      %p24 = scmp.ge.s32.totalorder %s23, 6
      %s30 = sphi 0, %s49
      %s31 = sphi 0, %s45
      %s32 = sphi 0, %s41
      %s33 = sphi 0, %s30
      %s34 = sphi 0, %s31
      %s35 = sphi 0, %s32
      %s36 = sphi 0, %s33
      %s37 = sphi 0, %s34
      %s38 = sphi 0, %s35
      %s54 = sphi 0, %s56
      %s57 = sphi 0, %s54
      %s58 = sphi 0, %s57
      %s74 = sphi 0, %s58
      %s82 = sphi 0, %s84
      %s85 = sphi 0, %s82
      %s86 = sphi 0, %s85
      %s102 = sphi 0, %s86
      %s106 = sphi 0, %s106
      %s108 = sphi 0, %s106
      %s109 = sphi 0, %s108
      %s123 = sphi 0, %s109
      %s127 = sphi 0, %s127
      %s129 = sphi 0, %s127
      %s130 = sphi 0, %s129
      %s144 = sphi 0, %s130
      %s150 = sphi 0, %s152
      %s153 = sphi 0, %s150
      %s154 = sphi 0, %s153
      %s170 = sphi 0, %s154
      %s176 = sphi 0, %s178
      %s179 = sphi 0, %s176
      %s180 = sphi 0, %s179
      %s196 = sphi 0, %s180
      %s204 = sphi 0, %s206
      %s207 = sphi 0, %s204
      %s208 = sphi 0, %s207
      %s224 = sphi 0, %s208
    $region4: #{simple_retention.1} parent=1 // loop_header_branch
      %26 = sbr.rel (%p24) target = $region8
    $region5: #{simple_retention.1} parent=1 // loop_body
      %s28 = ssub.s32 %s23, 1
      %s29 = ssub.s32 %s23, 2
      %s39 = sadd.s32 1, %s32
      %p40 = scmp.ge.s32.totalorder %s39, 1
      %s41 = scalar_select %p40, 0, %s39
      %s42 = sadd.s32 1, %s31
      %s43 = scalar_select %p40, %s42, %s31
      %p44 = scmp.ge.s32.totalorder %s43, 1
      %s45 = scalar_select %p44, 0, %s43
      %s46 = sadd.s32 1, %s30
      %s47 = scalar_select %p44, %s46, %s30
      %p48 = scmp.ge.s32.totalorder %s47, 4
      %s49 = scalar_select %p48, 0, %s47
      %s50 = ssub.s32 %s30, %s49
      %s51 = ssub.s32 %s31, %s45
      %s52 = sor.u32 %s50, %s51
      %p53 = scmp.eq.s32.totalorder %s52, 0
      %s55 = sadd.s32 %s54, 1
      %s56 = scalar_select %p53, %s54, %s55
      %p59 = pneg %p53
      %p60 = scmp.eq.s32.totalorder %s23, 3
      %p61 = por %p59, %p60
      %p62 = scmp.ne.s32.totalorder %s54, %s57
      %p63 = scmp.eq.s32.totalorder %s23, 0
      %p64 = por %p62, %p63
      %p65 = scmp.ne.s32.totalorder %s54, %s57
      %p66 = scmp.eq.s32.totalorder %s28, 3
      %p67 = por %p65, %p66
      %p68 = scmp.ne.s32.totalorder %s57, %s58
      %p69 = scmp.eq.s32.totalorder %s28, 0
      %p70 = por %p68, %p69
      %p71 = scmp.ne.s32.totalorder %s57, %s58
      %p72 = scmp.eq.s32.totalorder %s29, 3
      %p73 = por %p71, %p72
      %p75 = scmp.ne.s32.totalorder %s58, %s74
      %p76 = scmp.eq.s32.totalorder %s29, 0
      %p77 = por %p75, %p76
      %s78 = ssub.s32 %s30, %s49
      %s79 = ssub.s32 %s32, %s41
      %s80 = sor.u32 %s78, %s79
      %p81 = scmp.eq.s32.totalorder %s80, 0
      %s83 = sadd.s32 %s82, 1
      %s84 = scalar_select %p81, %s82, %s83
      %p87 = pneg %p81
      %p88 = scmp.eq.s32.totalorder %s23, 3
      %p89 = por %p87, %p88
      %p90 = scmp.ne.s32.totalorder %s82, %s85
      %p91 = scmp.eq.s32.totalorder %s23, 0
      %p92 = por %p90, %p91
      %p93 = scmp.ne.s32.totalorder %s82, %s85
      %p94 = scmp.eq.s32.totalorder %s28, 3
      %p95 = por %p93, %p94
      %p96 = scmp.ne.s32.totalorder %s85, %s86
      %p97 = scmp.eq.s32.totalorder %s28, 0
      %p98 = por %p96, %p97
      %p99 = scmp.ne.s32.totalorder %s85, %s86
      %p100 = scmp.eq.s32.totalorder %s29, 3
      %p101 = por %p99, %p100
      %p103 = scmp.ne.s32.totalorder %s86, %s102
      %p104 = scmp.eq.s32.totalorder %s29, 0
      %p105 = por %p103, %p104
      %s107 = sadd.s32 %s106, 1
      %p110 = scmp.eq.s32.totalorder %s23, 3
      %p111 = scmp.ne.s32.totalorder %s106, %s108
      %p112 = scmp.eq.s32.totalorder %s23, 0
      %p113 = por %p111, %p112
      %p114 = scmp.ne.s32.totalorder %s106, %s108
      %p115 = scmp.eq.s32.totalorder %s28, 3
      %p116 = por %p114, %p115
      %p117 = scmp.ne.s32.totalorder %s108, %s109
      %p118 = scmp.eq.s32.totalorder %s28, 0
      %p119 = por %p117, %p118
      %p120 = scmp.ne.s32.totalorder %s108, %s109
      %p121 = scmp.eq.s32.totalorder %s29, 3
      %p122 = por %p120, %p121
      %p124 = scmp.ne.s32.totalorder %s109, %s123
      %p125 = scmp.eq.s32.totalorder %s29, 0
      %p126 = por %p124, %p125
      %s128 = sadd.s32 %s127, 1
      %p131 = scmp.eq.s32.totalorder %s23, 3
      %p132 = scmp.ne.s32.totalorder %s127, %s129
      %p133 = scmp.eq.s32.totalorder %s23, 0
      %p134 = por %p132, %p133
      %p135 = scmp.ne.s32.totalorder %s127, %s129
      %p136 = scmp.eq.s32.totalorder %s28, 3
      %p137 = por %p135, %p136
      %p138 = scmp.ne.s32.totalorder %s129, %s130
      %p139 = scmp.eq.s32.totalorder %s28, 0
      %p140 = por %p138, %p139
      %p141 = scmp.ne.s32.totalorder %s129, %s130
      %p142 = scmp.eq.s32.totalorder %s29, 3
      %p143 = por %p141, %p142
      %p145 = scmp.ne.s32.totalorder %s130, %s144
      %p146 = scmp.eq.s32.totalorder %s29, 0
      %p147 = por %p145, %p146
      %s148 = ssub.s32 %s31, %s45
      %p149 = scmp.eq.s32.totalorder %s148, 0
      %s151 = sadd.s32 %s150, 1
      %s152 = scalar_select %p149, %s150, %s151
      %p155 = pneg %p149
      %p156 = scmp.eq.s32.totalorder %s23, 3
      %p157 = por %p155, %p156
      %p158 = scmp.ne.s32.totalorder %s150, %s153
      %p159 = scmp.eq.s32.totalorder %s23, 0
      %p160 = por %p158, %p159
      %p161 = scmp.ne.s32.totalorder %s150, %s153
      %p162 = scmp.eq.s32.totalorder %s28, 3
      %p163 = por %p161, %p162
      %p164 = scmp.ne.s32.totalorder %s153, %s154
      %p165 = scmp.eq.s32.totalorder %s28, 0
      %p166 = por %p164, %p165
      %p167 = scmp.ne.s32.totalorder %s153, %s154
      %p168 = scmp.eq.s32.totalorder %s29, 3
      %p169 = por %p167, %p168
      %p171 = scmp.ne.s32.totalorder %s154, %s170
      %p172 = scmp.eq.s32.totalorder %s29, 0
      %p173 = por %p171, %p172
      %s174 = ssub.s32 %s32, %s41
      %p175 = scmp.eq.s32.totalorder %s174, 0
      %s177 = sadd.s32 %s176, 1
      %s178 = scalar_select %p175, %s176, %s177
      %p181 = pneg %p175
      %p182 = scmp.eq.s32.totalorder %s23, 3
      %p183 = por %p181, %p182
      %p184 = scmp.ne.s32.totalorder %s176, %s179
      %p185 = scmp.eq.s32.totalorder %s23, 0
      %p186 = por %p184, %p185
      %p187 = scmp.ne.s32.totalorder %s176, %s179
      %p188 = scmp.eq.s32.totalorder %s28, 3
      %p189 = por %p187, %p188
      %p190 = scmp.ne.s32.totalorder %s179, %s180
      %p191 = scmp.eq.s32.totalorder %s28, 0
      %p192 = por %p190, %p191
      %p193 = scmp.ne.s32.totalorder %s179, %s180
      %p194 = scmp.eq.s32.totalorder %s29, 3
      %p195 = por %p193, %p194
      %p197 = scmp.ne.s32.totalorder %s180, %s196
      %p198 = scmp.eq.s32.totalorder %s29, 0
      %p199 = por %p197, %p198
      %s200 = ssub.s32 %s30, %s49
      %s201 = ssub.s32 %s31, %s45
      %s202 = sor.u32 %s200, %s201
      %p203 = scmp.eq.s32.totalorder %s202, 0
      %s205 = sadd.s32 %s204, 1
      %s206 = scalar_select %p203, %s204, %s205
      %p209 = pneg %p203
      %p210 = scmp.eq.s32.totalorder %s23, 3
      %p211 = por %p209, %p210
      %p212 = scmp.ne.s32.totalorder %s204, %s207
      %p213 = scmp.eq.s32.totalorder %s23, 0
      %p214 = por %p212, %p213
      %p215 = scmp.ne.s32.totalorder %s204, %s207
      %p216 = scmp.eq.s32.totalorder %s28, 3
      %p217 = por %p215, %p216
      %p218 = scmp.ne.s32.totalorder %s207, %s208
      %p219 = scmp.eq.s32.totalorder %s28, 0
      %p220 = por %p218, %p219
      %p221 = scmp.ne.s32.totalorder %s207, %s208
      %p222 = scmp.eq.s32.totalorder %s29, 3
      %p223 = por %p221, %p222
      %p225 = scmp.ne.s32.totalorder %s208, %s224
      %p226 = scmp.eq.s32.totalorder %s29, 0
      %p227 = por %p225, %p226
      %p228 = scmp.le.s32.totalorder 1, %s23
      %p229 = scmp.lt.s32.totalorder %s23, 5
      %p230 = pnand %p228, %p229
      %p231 = pneg %p230
      // Predicated region
      $region9: #{simple_retention.1} parent=5 // pred_check
        _
      $region10: #{simple_retention.1} parent=5 // pred_check_branch
        %233 = sbr.rel (%p230) target = $region12
      $region11: #{simple_retention.1} parent=5 // pred_region
        %s234 = ssub.s32 %s23, 1
        // Predicated region
        $region13: #{simple_retention.1} parent=11 // pred_check
          %p235 = pneg %p119
        $region14: #{simple_retention.1} parent=11 // pred_check_branch
          %237 = sbr.rel (%p235) target = $region16
        $region15: #{simple_retention.1} parent=11 // pred_region
          %s239 = ssub.s32 256, 256
          %240 = vsyncadd [#allocation8], %s239
          %s241 = sshll.u32 [#allocation9], 4
          %s242 = int_to_ptr.vmem [resolvable:$true] %s241
          %247 = dma.hbm_to_vmem [thread:$0]  %s2, 256, %s242, [#allocation8], 64, 64, 4
        $region16: #{simple_retention.1} parent=11 // pred_fallthru
          _
        // Predicated region
        $region17: #{simple_retention.1} parent=11 // pred_check
          %p248 = pneg %p140
        $region18: #{simple_retention.1} parent=11 // pred_check_branch
          %250 = sbr.rel (%p248) target = $region20
        $region19: #{simple_retention.1} parent=11 // pred_region
          %s252 = ssub.s32 256, 256
          %253 = vsyncadd [#allocation11], %s252
          %s254 = sshll.u32 [#allocation10], 4
          %s255 = int_to_ptr.vmem [resolvable:$true] %s254
          %260 = dma.hbm_to_vmem [thread:$0]  %s3, 256, %s255, [#allocation11], 64, 64, 4
        $region20: #{simple_retention.1} parent=11 // pred_fallthru
          _
        // Predicated region
        $region21: #{simple_retention.1} parent=11 // pred_check
          %p261 = pneg %p166
        $region22: #{simple_retention.1} parent=11 // pred_check_branch
          %263 = sbr.rel (%p261) target = $region24
        $region23: #{simple_retention.1} parent=11 // pred_region
          %s265 = ssub.s32 128, 128
          %266 = vsyncadd [#allocation11], %s265
          %s267 = smul.addr %s34, 128
          %s268 = scalar_lea.hbm %s4, %s267
          %s270 = sshll.u32 [#allocation12], 4
          %s271 = int_to_ptr.vmem [resolvable:$true] %s270
          %273 = dma.hbm_to_vmem [thread:$0]  %s268, 128, %s271, [#allocation11]
        $region24: #{simple_retention.1} parent=11 // pred_fallthru
          _
        // Predicated region
        $region25: #{simple_retention.1} parent=11 // pred_check
          %p274 = pneg %p192
        $region26: #{simple_retention.1} parent=11 // pred_check_branch
          %276 = sbr.rel (%p274) target = $region28
        $region27: #{simple_retention.1} parent=11 // pred_region
          %s278 = ssub.s32 128, 128
          %279 = vsyncadd [#allocation14], %s278
          %s280 = smul.addr %s35, 128
          %s281 = scalar_lea.hbm %s5, %s280
          %s283 = sshll.u32 [#allocation13], 4
          %s284 = int_to_ptr.vmem [resolvable:$true] %s283
          %286 = dma.hbm_to_vmem [thread:$0]  %s281, 128, %s284, [#allocation14]
        $region28: #{simple_retention.1} parent=11 // pred_fallthru
          _
      $region12: #{simple_retention.1} parent=5 // pred_fallthru
        _
      %p287 = scmp.lt.s32.totalorder %s23, 4
      // Predicated region
      $region29: #{simple_retention.1} parent=5 // pred_check
        %p288 = pneg %p287
      $region30: #{simple_retention.1} parent=5 // pred_check_branch
        %290 = sbr.rel (%p288) target = $region32
      $region31: #{simple_retention.1} parent=5 // pred_region
        // Predicated region
        $region33: #{simple_retention.1} parent=31 // pred_check
          %p291 = pneg %p64
        $region34: #{simple_retention.1} parent=31 // pred_check_branch
          %293 = sbr.rel (%p291) target = $region36
        $region35: #{simple_retention.1} parent=31 // pred_region
          %s294 = sand.u32 %s54, 1
          %s295 = scalar_lea.sflag [#allocation5], %s294
          %s296 = sand.u32 %s54, 1
          %s297 = smul.addr %s296, 4
          %s298 = scalar_lea.vmem [#allocation4], %s297
          %s300 = ssub.s32 64, 64
          %301 = vsyncadd %s295, %s300
          %s302 = sadd.s32 %s31, %s30
          %s303 = smul.addr %s302, 64
          %s304 = scalar_lea.hbm %s0, %s303
          %s306 = sshll.u32 %s298, 4
          %s307 = int_to_ptr.vmem [resolvable:$true] %s306
          %309 = dma.hbm_to_vmem [thread:$0]  %s304, 64, %s307, %s295
        $region36: #{simple_retention.1} parent=31 // pred_fallthru
          _
        // Predicated region
        $region37: #{simple_retention.1} parent=31 // pred_check
          %p310 = pneg %p92
        $region38: #{simple_retention.1} parent=31 // pred_check_branch
          %312 = sbr.rel (%p310) target = $region40
        $region39: #{simple_retention.1} parent=31 // pred_region
          %s313 = sand.u32 %s23, 1
          %s314 = scalar_lea.sflag [#allocation8], %s313
          %s315 = sand.u32 %s82, 1
          %s316 = smul.addr %s315, 4
          %s317 = scalar_lea.vmem [#allocation7], %s316
          %s319 = ssub.s32 64, 64
          %320 = vsyncadd %s314, %s319
          %s321 = sadd.s32 %s32, %s30
          %s322 = smul.addr %s321, 64
          %s323 = scalar_lea.hbm %s1, %s322
          %s325 = sshll.u32 %s317, 4
          %s326 = int_to_ptr.vmem [resolvable:$true] %s325
          %328 = dma.hbm_to_vmem [thread:$0]  %s323, 64, %s326, %s314
        $region40: #{simple_retention.1} parent=31 // pred_fallthru
          _
      $region32: #{simple_retention.1} parent=5 // pred_fallthru
        _
      %p329 = scmp.le.s32.totalorder 1, %s23
      %p330 = scmp.lt.s32.totalorder %s23, 5
      %p331 = pnand %p329, %p330
      %p332 = pneg %p331
      // Predicated region
      $region41: #{simple_retention.1} parent=5 // pred_check
        _
      $region42: #{simple_retention.1} parent=5 // pred_check_branch
        %334 = sbr.rel (%p331) target = $region44
      $region43: #{simple_retention.1} parent=5 // pred_region
        %s335 = ssub.s32 %s23, 1
        %s336 = sand.u32 %s57, 1
        %s337 = scalar_lea.sflag [#allocation5], %s336
        %s338 = sand.u32 %s57, 1
        %s339 = smul.addr %s338, 4
        %s340 = scalar_lea.vmem [#allocation4], %s339
        // Predicated region
        $region45: #{simple_retention.1} parent=43 // pred_check
          %p341 = pneg %p70
        $region46: #{simple_retention.1} parent=43 // pred_check_branch
          %343 = sbr.rel (%p341) target = $region48
        $region47: #{simple_retention.1} parent=43 // pred_region
          %344 = dma.done %s337, 64
        $region48: #{simple_retention.1} parent=43 // pred_fallthru
          _
        %s345 = sand.u32 %s28, 1
        %s346 = scalar_lea.sflag [#allocation8], %s345
        %s347 = sand.u32 %s85, 1
        %s348 = smul.addr %s347, 4
        %s349 = scalar_lea.vmem [#allocation7], %s348
        // Predicated region
        $region49: #{simple_retention.1} parent=43 // pred_check
          %p350 = pneg %p98
        $region50: #{simple_retention.1} parent=43 // pred_check_branch
          %352 = sbr.rel (%p350) target = $region52
        $region51: #{simple_retention.1} parent=43 // pred_region
          %353 = dma.done %s346, 64
        $region52: #{simple_retention.1} parent=43 // pred_fallthru
          _
        // Predicated region
        $region53: #{simple_retention.1} parent=43 // pred_check
          %p354 = pneg %p119
        $region54: #{simple_retention.1} parent=43 // pred_check_branch
          %356 = sbr.rel (%p354) target = $region56
        $region55: #{simple_retention.1} parent=43 // pred_region
          %357 = dma.done [#allocation8], 256
        $region56: #{simple_retention.1} parent=43 // pred_fallthru
          _
        // Predicated region
        $region57: #{simple_retention.1} parent=43 // pred_check
          %p358 = pneg %p140
        $region58: #{simple_retention.1} parent=43 // pred_check_branch
          %360 = sbr.rel (%p358) target = $region60
        $region59: #{simple_retention.1} parent=43 // pred_region
          %361 = dma.done [#allocation11], 256
        $region60: #{simple_retention.1} parent=43 // pred_fallthru
          _
        // Predicated region
        $region61: #{simple_retention.1} parent=43 // pred_check
          %p362 = pneg %p166
        $region62: #{simple_retention.1} parent=43 // pred_check_branch
          %364 = sbr.rel (%p362) target = $region64
        $region63: #{simple_retention.1} parent=43 // pred_region
          %365 = dma.done [#allocation11], 128
        $region64: #{simple_retention.1} parent=43 // pred_fallthru
          _
        // Predicated region
        $region65: #{simple_retention.1} parent=43 // pred_check
          %p366 = pneg %p192
        $region66: #{simple_retention.1} parent=43 // pred_check_branch
          %368 = sbr.rel (%p366) target = $region68
        $region67: #{simple_retention.1} parent=43 // pred_region
          %369 = dma.done [#allocation14], 128
        $region68: #{simple_retention.1} parent=43 // pred_fallthru
          _
        %s370 = sand.u32 %s57, 1
        %s371 = scalar_lea.sflag [#allocation5], %s370
        %s372 = sand.u32 %s57, 1
        %s373 = smul.addr %s372, 4
        %s374 = scalar_lea.vmem [#allocation4], %s373
        %p375 = pneg %p70
        %p376 = pneg %p67
        %s377 = sand.u32 %s28, 1
        %s378 = scalar_lea.sflag [#allocation8], %s377
        %s379 = sand.u32 %s85, 1
        %s380 = smul.addr %s379, 4
        %s381 = scalar_lea.vmem [#allocation7], %s380
        %p382 = pneg %p98
        %p383 = pneg %p95
        %p384 = pneg %p119
        %p385 = pneg %p116
        %p386 = pneg %p140
        %p387 = pneg %p137
        %p388 = pneg %p166
        %p389 = pneg %p163
        %p390 = pneg %p192
        %p391 = pneg %p189
        %p392 = pneg %p220
        %p393 = pneg %p217
        %s394 = sand.u32 %s207, 1
        %s395 = scalar_lea.sflag [#allocation6], %s394
        %s396 = sand.u32 %s207, 1
        %s397 = smul.addr %s396, 8
        %s398 = scalar_lea.vmem [#allocation15], %s397
        %p400 = scmp.eq.s32.totalorder %s35, 0
        // Predicated region
        $region69: #{simple_retention.1} parent=43 // pred_check
          %p401 = pneg %p400
        $region70: #{simple_retention.1} parent=43 // pred_check_branch
          %403 = sbr.rel (%p401) target = $region72
        $region71: #{simple_retention.1} parent=43 // pred_region
          %v404 = vld [vmem:[%s340] sm:$0xf]
          %v405 = vld [vmem:[#allocation9] sm:$0xf]
          %v406 = vld [vmem:[#allocation9 + $0x4] sm:$0xf]
          %v407 = vld [vmem:[#allocation9 + $0x8] sm:$0xf]
          %v408 = vld [vmem:[#allocation9 + $0xc] sm:$0xf]
          %v413 = vunpack.c.l.b16 %v405
          %v414 = vunpack.c.l.b16 %v406
          %v415 = vunpack.c.l.b16 %v407
          %v416 = vunpack.c.l.b16 %v408
          %v417 = vpack.c.b16 %v414, %v413
          %v418 = vpack.c.b16 %v416, %v415
          %vm421 = vcmask 261120
          %v423 = vsel %vm421, %v404, 0
          %425 = vmatprep.subr.bf16.mxu0 0
          %426 = vmatpush1.bf16.msra.mxu0 %v417
          %427 = vmatprep.subr.bf16.mxu0 0
          %428 = vmatpush1.bf16.msra.mxu0 %v418
          %429 = vmatprep.subr.bf16.mxu0 0
          %430 = vmatpush1.bf16.msra.mxu0 0
          %431 = vmatprep.subr.bf16.mxu0 0
          %432 = vmatpush1.bf16.msra.mxu0 0
          %433 = vmatprep.subr.bf16.mxu0 0
          %434 = vmatpush1.bf16.msra.mxu0 0
          %435 = vmatprep.subr.bf16.mxu0 0
          %436 = vmatpush1.bf16.msra.mxu0 0
          %437 = vmatprep.subr.bf16.mxu0 0
          %438 = vmatpush1.bf16.msra.mxu0 0
          %439 = vmatprep.subr.bf16.mxu0 0
          %440 = vmatpush1.bf16.msra.mxu0 0
          %441 = vmatprep.subr.bf16.mxu0 0
          %442 = vmatpush1.bf16.msra.mxu0 0
          %443 = vmatprep.subr.bf16.mxu0 0
          %444 = vmatpush1.bf16.msra.mxu0 0
          %445 = vmatprep.subr.bf16.mxu0 0
          %446 = vmatpush1.bf16.msra.mxu0 0
          %447 = vmatprep.subr.bf16.mxu0 0
          %448 = vmatpush1.bf16.msra.mxu0 0
          %449 = vmatprep.subr.bf16.mxu0 0
          %450 = vmatpush1.bf16.msra.mxu0 0
          %451 = vmatprep.subr.bf16.mxu0 0
          %452 = vmatpush1.bf16.msra.mxu0 0
          %453 = vmatprep.subr.bf16.mxu0 0
          %454 = vmatpush1.bf16.msra.mxu0 0
          %455 = vmatprep.subr.bf16.mxu0 0
          %456 = vmatpush1.bf16.msra.mxu0 0
          %457 = vmatprep.mubr.bf16.mxu0 0
          %458 = vmatmul.mubr.bf16.gmra.mrb[0].mxu0 %v423
          %v459 = vpop.f32.mrb[0].mxu0
          %v460 = vadd.f32 0.0, %v459
          %v461 = vpop.f32.mrb[0].mxu0
          %v462 = vpop.f32.mrb[0].mxu0
          %v463 = vpop.f32.mrb[0].mxu0
          %464 = vdwg.mxu0
          %v465 = vld [vmem:[#allocation12] sm:$0xff]
          %v466 = vmul.f32 %v460, %v465
          %468 = vrot.lane.b32.xlu0 %v466, 96
          %v469 = vpop.permute.xlu0 %468
          %v471 = vadd.f32 %v466, %v469
          %v472 = vpack.c.bf16 %v471, %v471
          %vm473 = vcmask 257024
          %474 = vst.msk [vmem:[#allocation2] sm:$0xf] %vm473, %v472
          %475 = vst.msk [vmem:[#allocation3] sm:$0xff] %vm421, 0.0
        $region72: #{simple_retention.1} parent=43 // pred_fallthru
          _
        %s476 = smul.u32 %s35, 8
        %s477 = smul.u32 %s34, 8
        %s478 = sadd.s32 %s477, 7
        %p479 = scmp.le.s32.totalorder %s476, %s478
        // Predicated region
        $region73: #{simple_retention.1} parent=43 // pred_check
          %p480 = pneg %p479
        $region74: #{simple_retention.1} parent=43 // pred_check_branch
          %482 = sbr.rel (%p480) target = $region76
        $region75: #{simple_retention.1} parent=43 // pred_region
          %v483 = vld [vmem:[%s349] sm:$0xf]
          %v484 = vld [vmem:[#allocation10] sm:$0xf]
          %v485 = vld [vmem:[#allocation10 + $0x4] sm:$0xf]
          %v486 = vld [vmem:[#allocation10 + $0x8] sm:$0xf]
          %v487 = vld [vmem:[#allocation10 + $0xc] sm:$0xf]
          %v492 = vunpack.c.l.b16 %v484
          %v493 = vunpack.c.l.b16 %v485
          %v494 = vunpack.c.l.b16 %v486
          %v495 = vunpack.c.l.b16 %v487
          %v496 = vpack.c.b16 %v493, %v492
          %v497 = vpack.c.b16 %v495, %v494
          %vm500 = vcmask 261120
          %v502 = vsel %vm500, %v483, 0
          %504 = vmatprep.subr.bf16.mxu0 0
          %505 = vmatpush1.bf16.msra.mxu0 %v496
          %506 = vmatprep.subr.bf16.mxu0 0
          %507 = vmatpush1.bf16.msra.mxu0 %v497
          %508 = vmatprep.subr.bf16.mxu0 0
          %509 = vmatpush1.bf16.msra.mxu0 0
          %510 = vmatprep.subr.bf16.mxu0 0
          %511 = vmatpush1.bf16.msra.mxu0 0
          %512 = vmatprep.subr.bf16.mxu0 0
          %513 = vmatpush1.bf16.msra.mxu0 0
          %514 = vmatprep.subr.bf16.mxu0 0
          %515 = vmatpush1.bf16.msra.mxu0 0
          %516 = vmatprep.subr.bf16.mxu0 0
          %517 = vmatpush1.bf16.msra.mxu0 0
          %518 = vmatprep.subr.bf16.mxu0 0
          %519 = vmatpush1.bf16.msra.mxu0 0
          %520 = vmatprep.subr.bf16.mxu0 0
          %521 = vmatpush1.bf16.msra.mxu0 0
          %522 = vmatprep.subr.bf16.mxu0 0
          %523 = vmatpush1.bf16.msra.mxu0 0
          %524 = vmatprep.subr.bf16.mxu0 0
          %525 = vmatpush1.bf16.msra.mxu0 0
          %526 = vmatprep.subr.bf16.mxu0 0
          %527 = vmatpush1.bf16.msra.mxu0 0
          %528 = vmatprep.subr.bf16.mxu0 0
          %529 = vmatpush1.bf16.msra.mxu0 0
          %530 = vmatprep.subr.bf16.mxu0 0
          %531 = vmatpush1.bf16.msra.mxu0 0
          %532 = vmatprep.subr.bf16.mxu0 0
          %533 = vmatpush1.bf16.msra.mxu0 0
          %534 = vmatprep.subr.bf16.mxu0 0
          %535 = vmatpush1.bf16.msra.mxu0 0
          %536 = vmatprep.mubr.bf16.mxu0 0
          %537 = vmatmul.mubr.bf16.gmra.mrb[0].mxu0 %v502
          %v538 = vpop.f32.mrb[0].mxu0
          %v539 = vadd.f32 0.0, %v538
          %v540 = vpop.f32.mrb[0].mxu0
          %v541 = vpop.f32.mrb[0].mxu0
          %v542 = vpop.f32.mrb[0].mxu0
          %543 = vdwg.mxu0
          %v544 = vld [vmem:[#allocation13] sm:$0xff]
          %546 = vrot.lane.b32.xlu0 %v544, 64
          %v547 = vpop.permute.xlu0 %546
          %v549 = vmul.f32 %v539, %v547
          %551 = vrot.lane.b32.xlu0 %v549, 96
          %v552 = vpop.permute.xlu0 %551
          %v554 = vadd.f32 %v549, %v552
          %v555 = vld [vmem:[#allocation2] sm:$0xf]
          %v556 = vpack.c.bf16 %v554, %v554
          %v558 = vsel %vm500, %v555, 0
          %v561 = vsel %vm500, %v556, 0
          %563 = vmatprep.subr.bf16.mxu0 0
          %564 = vmatpush1.bf16.xpose.msra.mxu0 %v561
          %565 = vmatprep.subr.bf16.mxu0 0
          %566 = vmatpush1.bf16.xpose.msra.mxu0 0
          %567 = vmatprep.subr.bf16.mxu0 0
          %568 = vmatpush1.bf16.xpose.msra.mxu0 0
          %569 = vmatprep.subr.bf16.mxu0 0
          %570 = vmatpush1.bf16.xpose.msra.mxu0 0
          %571 = vmatprep.subr.bf16.mxu0 0
          %572 = vmatpush1.bf16.xpose.msra.mxu0 0
          %573 = vmatprep.subr.bf16.mxu0 0
          %574 = vmatpush1.bf16.xpose.msra.mxu0 0
          %575 = vmatprep.subr.bf16.mxu0 0
          %576 = vmatpush1.bf16.xpose.msra.mxu0 0
          %577 = vmatprep.subr.bf16.mxu0 0
          %578 = vmatpush1.bf16.xpose.msra.mxu0 0
          %579 = vmatprep.subr.bf16.mxu0 0
          %580 = vmatpush1.bf16.xpose.msra.mxu0 0
          %581 = vmatprep.subr.bf16.mxu0 0
          %582 = vmatpush1.bf16.xpose.msra.mxu0 0
          %583 = vmatprep.subr.bf16.mxu0 0
          %584 = vmatpush1.bf16.xpose.msra.mxu0 0
          %585 = vmatprep.subr.bf16.mxu0 0
          %586 = vmatpush1.bf16.xpose.msra.mxu0 0
          %587 = vmatprep.subr.bf16.mxu0 0
          %588 = vmatpush1.bf16.xpose.msra.mxu0 0
          %589 = vmatprep.subr.bf16.mxu0 0
          %590 = vmatpush1.bf16.xpose.msra.mxu0 0
          %591 = vmatprep.subr.bf16.mxu0 0
          %592 = vmatpush1.bf16.xpose.msra.mxu0 0
          %593 = vmatprep.subr.bf16.mxu0 0
          %594 = vmatpush1.bf16.xpose.msra.mxu0 0
          %595 = vmatprep.mubr.bf16.mxu0 0
          %596 = vmatmul.mubr.bf16.gmra.mrb[0].mxu0 %v558
          %v597 = vpop.f32.mrb[0].mxu0
          %v598 = vadd.f32 0.0, %v597
          %v599 = vpop.f32.mrb[0].mxu0
          %v600 = vpop.f32.mrb[0].mxu0
          %v601 = vpop.f32.mrb[0].mxu0
          %602 = vdwg.mxu0
          %v603 = vlaneseq
          %v604 = vshrl.u32 %v603, 7
          %v605 = vstv %s477
          %v606 = vadd.s32 %v605, %v604
          %v607 = vlaneseq
          %v608 = vand.u32 %v607, 127
          %v609 = vstv %s476
          %v610 = vadd.s32 %v609, %v608
          %vm611 = vcmp.ge.s32.totalorder %v606, %v610
          %v612 = vsub.s32 %v606, %v610
          %v613 = vcvt.s32.f32 %v612
          %v614 = vsel %vm611, %v613, 0.0
          %v615 = vmul.f32 %v614, -0.105360515
          %v616 = vmul.f32 %v615, 1.442695
          %v617 = vpow.pop %v616
          %v618 = vsel %vm611, %v617, 0.0
          %v619 = vld [vmem:[#allocation3] sm:$0xff]
          %v620 = vmul.f32 %v598, %v618
          %v621 = vpack.c.bf16 %v620, %v620
          %v622 = vpack.c.bf16 %v539, %v539
          %624 = vrot.lane.b32.xlu0 %v622, 64
          %v625 = vpop.permute.xlu0 %624
          %vm626 = vcmask 64512
          %v628 = vsel %vm626, %v621, 0
          %vm630 = vcmask 1043456
          %v632 = vsel %vm630, %v625, 0
          %634 = vmatprep.subr.bf16.mxu0 0
          %635 = vmatpush1.bf16.msra.mxu0 %v632
          %636 = vmatprep.subr.bf16.mxu0 0
          %637 = vmatpush1.bf16.msra.mxu0 0
          %638 = vmatprep.subr.bf16.mxu0 0
          %639 = vmatpush1.bf16.msra.mxu0 0
          %640 = vmatprep.subr.bf16.mxu0 0
          %641 = vmatpush1.bf16.msra.mxu0 0
          %642 = vmatprep.subr.bf16.mxu0 0
          %643 = vmatpush1.bf16.msra.mxu0 0
          %644 = vmatprep.subr.bf16.mxu0 0
          %645 = vmatpush1.bf16.msra.mxu0 0
          %646 = vmatprep.subr.bf16.mxu0 0
          %647 = vmatpush1.bf16.msra.mxu0 0
          %648 = vmatprep.subr.bf16.mxu0 0
          %649 = vmatpush1.bf16.msra.mxu0 0
          %650 = vmatprep.subr.bf16.mxu0 0
          %651 = vmatpush1.bf16.msra.mxu0 0
          %652 = vmatprep.subr.bf16.mxu0 0
          %653 = vmatpush1.bf16.msra.mxu0 0
          %654 = vmatprep.subr.bf16.mxu0 0
          %655 = vmatpush1.bf16.msra.mxu0 0
          %656 = vmatprep.subr.bf16.mxu0 0
          %657 = vmatpush1.bf16.msra.mxu0 0
          %658 = vmatprep.subr.bf16.mxu0 0
          %659 = vmatpush1.bf16.msra.mxu0 0
          %660 = vmatprep.subr.bf16.mxu0 0
          %661 = vmatpush1.bf16.msra.mxu0 0
          %662 = vmatprep.subr.bf16.mxu0 0
          %663 = vmatpush1.bf16.msra.mxu0 0
          %664 = vmatprep.subr.bf16.mxu0 0
          %665 = vmatpush1.bf16.msra.mxu0 0
          %666 = vmatprep.mubr.bf16.mxu0 0
          %667 = vmatmul.mubr.bf16.gmra.mrb[0].mxu0 %v628
          %v668 = vpop.f32.mrb[0].mxu0
          %v669 = vadd.f32 0.0, %v668
          %v670 = vpop.f32.mrb[0].mxu0
          %v671 = vpop.f32.mrb[0].mxu0
          %v672 = vpop.f32.mrb[0].mxu0
          %673 = vdwg.mxu0
          %v674 = vadd.f32 %v619, %v669
          %675 = vst.msk [vmem:[#allocation3] sm:$0xff] %vm500, %v674
        $region76: #{simple_retention.1} parent=43 // pred_fallthru
          _
        // Predicated region
        $region77: #{simple_retention.1} parent=43 // pred_check
          %p676 = pneg %p400
        $region78: #{simple_retention.1} parent=43 // pred_check_branch
          %678 = sbr.rel (%p676) target = $region80
        $region79: #{simple_retention.1} parent=43 // pred_region
          %v679 = vld [vmem:[#allocation3] sm:$0xff]
          %vm680 = vcmask 261120
          %681 = vst.msk [vmem:[%s398] sm:$0xff] %vm680, %v679
        $region80: #{simple_retention.1} parent=43 // pred_fallthru
          _
        %s682 = sand.u32 %s207, 1
        %s683 = scalar_lea.sflag [#allocation6], %s682
        %s684 = sand.u32 %s207, 1
        %s685 = smul.addr %s684, 8
        %s686 = scalar_lea.vmem [#allocation15], %s685
        // Predicated region
        $region81: #{simple_retention.1} parent=43 // pred_check
          %p687 = pneg %p217
        $region82: #{simple_retention.1} parent=43 // pred_check_branch
          %689 = sbr.rel (%p687) target = $region84
        $region83: #{simple_retention.1} parent=43 // pred_region
          %s691 = ssub.s32 128, 128
          %692 = vsyncadd %s683, %s691
          %s693 = sadd.s32 %s34, %s33
          %s694 = smul.addr %s693, 128
          %s695 = scalar_lea.hbm %s6, %s694
          %s697 = sshll.u32 %s686, 4
          %s698 = int_to_ptr.vmem [resolvable:$true] %s697
          %700 = dma.vmem_to_hbm [thread:$0]  %s698, 128, %s695, %s683
        $region84: #{simple_retention.1} parent=43 // pred_fallthru
          _
      $region44: #{simple_retention.1} parent=5 // pred_fallthru
        _
      %p701 = scmp.le.s32.totalorder 2, %s23
      // Predicated region
      $region85: #{simple_retention.1} parent=5 // pred_check
        %p702 = pneg %p701
      $region86: #{simple_retention.1} parent=5 // pred_check_branch
        %704 = sbr.rel (%p702) target = $region88
      $region87: #{simple_retention.1} parent=5 // pred_region
        %s705 = ssub.s32 %s23, 2
        // Predicated region
        $region89: #{simple_retention.1} parent=87 // pred_check
          %p706 = pneg %p223
        $region90: #{simple_retention.1} parent=87 // pred_check_branch
          %708 = sbr.rel (%p706) target = $region92
        $region91: #{simple_retention.1} parent=87 // pred_region
          %s709 = sand.u32 %s208, 1
          %s710 = scalar_lea.sflag [#allocation6], %s709
          %s711 = sand.u32 %s208, 1
          %s712 = smul.addr %s711, 8
          %s713 = scalar_lea.vmem [#allocation15], %s712
          %714 = dma.done %s710, 128
        $region92: #{simple_retention.1} parent=87 // pred_fallthru
          _
      $region88: #{simple_retention.1} parent=5 // pred_fallthru
        _
    $region6: #{simple_retention.1} parent=1 // loop_footer
      %s27 = sadd.s32 1, %s23
    $region7: #{simple_retention.1} parent=1 // loop_footer_branch
      %22 = sbr.rel target = $region3
    $region8: #{simple_retention.1} parent=1 // loop_exit
      _
    %715 = vsyncpa [#allocation5], 1
    %s716 = scalar_lea.sflag [#allocation5], 1
    %717 = vsyncpa %s716, 1
    %718 = vsyncpa [#allocation8], 1
    %s719 = scalar_lea.sflag [#allocation8], 1
    %720 = vsyncpa %s719, 1
    %721 = vsyncpa [#allocation11], 1
    %722 = vsyncpa [#allocation14], 1
    %723 = vsyncpa [#allocation6], 1
    %s724 = scalar_lea.sflag [#allocation6], 1
    %725 = vsyncpa %s724, 1

</llo_original>
